<compile_context>
chip_gen: v5e
topology: v5e:2x2
jax: 0.10.0
libtpu: 0.0.40
codegen_flags: <defaults>
</compile_context>

<pallas_src>
import functools
import math

import jax
import jax.numpy as jnp
from jax.experimental import pallas as pl
from jax.experimental.pallas import tpu as pltpu


def _round_up(x, m):
    return ((x + m - 1) // m) * m


# ----------------------------- Pallas kernel ------------------------------ #
def _patch_embed_kernel(p_ref, w_ref, b_ref, o_ref):
    # p_ref: (tm, K)      patch rows (compute dtype, e.g. bf16)
    # w_ref: (K, E_pad)   reshaped conv weight (compute dtype)
    # b_ref: (1, E_pad)   bias, f32 (epilogue stays on the f32 accumulator)
    # o_ref: (tm, E_pad)  output tile (caller dtype), E_pad % 128 == 0
    acc = jnp.dot(p_ref[...], w_ref[...], preferred_element_type=jnp.float32)
    o_ref[...] = (acc + b_ref[...]).astype(o_ref.dtype)


def _patch_matmul(patches, w2d, bias_row, *, out_dtype):
    """patches (M, K) @ w2d (K, E_pad) + bias_row (1, E_pad) -> (M, E_pad)."""
    M, K = patches.shape
    E_pad = w2d.shape[1]

    # Row tile: prefer big tiles (roofline / per-step overhead), but do not
    # pay mostly for padding when M is small or awkward.  Never fall back to
    # "whole M in one block".
    tm = 128
    for cand in (512, 256, 128):
        waste = _round_up(M, cand) - M
        if waste <= cand // 2 or M >= 4 * cand:
            tm = cand
            break
    M_pad = _round_up(M, tm)
    if M_pad != M:
        # Single pad, directly to the tile multiple (fuses with the im2col
        # producer under jit).
        patches = jnp.pad(patches, ((0, M_pad - M), (0, 0)))

    grid = (M_pad // tm,)

    cost = pl.CostEstimate(
        flops=2 * M_pad * K * E_pad,
        transcendentals=0,
        bytes_accessed=(M_pad * K * patches.dtype.itemsize
                        + K * E_pad * w2d.dtype.itemsize
                        + E_pad * bias_row.dtype.itemsize
                        + M_pad * E_pad * jnp.dtype(out_dtype).itemsize),
    )

    out = pl.pallas_call(
        _patch_embed_kernel,
        out_shape=jax.ShapeDtypeStruct((M_pad, E_pad), out_dtype),
        grid_spec=pltpu.PrefetchScalarGridSpec(
            num_scalar_prefetch=0,
            grid=grid,
            in_specs=[
                pl.BlockSpec((tm, K), lambda i: (i, 0)),
                # Constant block index: fetched once, revisited thereafter.
                pl.BlockSpec((K, E_pad), lambda i: (0, 0)),
                pl.BlockSpec((1, E_pad), lambda i: (0, 0)),
            ],
            out_specs=pl.BlockSpec((tm, E_pad), lambda i: (i, 0)),
        ),
        compiler_params=pltpu.CompilerParams(
            dimension_semantics=("parallel",)),
        cost_estimate=cost,
    )(patches, w2d, bias_row)

    return out[:M]


# ----------------------------- Forward (jitted) ---------------------------- #
def _patch_embed_forward(x, w2d, bias_row, *, patch_size, padding, embed_dim,
                         compute_dtype):
    B, C, H, W = x.shape
    ph, pw = patch_size
    p1, p2 = padding

    # Cast to the compute dtype (bf16) *before* the im2col: halves the HBM
    # bytes moved by the patch rearrangement and the matmul input.
    xc = x.astype(compute_dtype)
    if p1 or p2:
        xc = jnp.pad(xc, ((0, 0), (0, 0), (p1, p1), (p2, p2)))
    Hp, Wp = xc.shape[2], xc.shape[3]
    nh, nw = Hp // ph, Wp // pw
    # Conv with stride == kernel drops any spatial remainder.
    xc = xc[:, :, :nh * ph, :nw * pw]

    # im2col (done by fused XLA ops inside this jitted function):
    # (B, C, nh, ph, nw, pw) -> (B, nh, nw, C, ph, pw) -> (M, K),
    # K ordered (c, ki, kj) to match the Conv2d weight layout.
    xc = xc.reshape(B, C, nh, ph, nw, pw)
    xc = jnp.transpose(xc, (0, 2, 4, 1, 3, 5))
    patches = xc.reshape(B * nh * nw, C * ph * pw)

    out = _patch_matmul(patches, w2d, bias_row, out_dtype=x.dtype)  # (M, E_pad)
    out = out[:, :embed_dim]                                        # crop E pad
    return out.reshape(B, nh * nw, embed_dim)


# ------------------------------ Module port -------------------------------- #
class PatchEmbedNew:
    """JAX/Pallas port of PatchEmbedNew (Conv2d kernel=stride=patch_size)."""

    def __init__(self, image_size, patch_size, in_chans=3, embed_dim=768,
                 key=jax.random.PRNGKey(0), dtype=jnp.float32,
                 compute_dtype=jnp.bfloat16):
        self.patch_size = tuple(patch_size)
        self.in_chans = in_chans
        self.embed_dim = embed_dim
        self.compute_dtype = compute_dtype
        # Same (odd-looking) padding formula as the PyTorch module.
        self.padding1 = math.ceil(image_size[0] % patch_size[0]) * patch_size[0] // 2
        self.padding2 = math.ceil(image_size[1] % patch_size[1]) * patch_size[1] // 2

        ph, pw = self.patch_size
        fan_in = in_chans * ph * pw
        kw_, kb_ = jax.random.split(key)
        bound = 1.0 / math.sqrt(fan_in)
        # Deterministic synthetic init (Conv2d-like uniform); shapes match
        # nn.Conv2d(in_chans, embed_dim, kernel_size=patch_size).
        self.weight = jax.random.uniform(
            kw_, (embed_dim, in_chans, ph, pw), dtype, -bound, bound)
        self.bias = jax.random.uniform(kb_, (embed_dim,), dtype, -bound, bound)

        # Pre-pack the projection for the kernel: (K, E_pad) in the compute
        # dtype, E padded to a multiple of 128 for lane-dense output stores.
        # Bias stays f32 (added on the f32 MXU accumulator).
        K = in_chans * ph * pw
        E_pad = _round_up(embed_dim, 128)
        w2d = self.weight.reshape(embed_dim, K).T.astype(compute_dtype)  # (K, E)
        self._w2d = jnp.pad(w2d, ((0, 0), (0, E_pad - embed_dim)))
        b = self.bias.astype(jnp.float32)
        self._bias_row = jnp.pad(b, (0, E_pad - embed_dim)).reshape(1, E_pad)

        self._forward = jax.jit(functools.partial(
            _patch_embed_forward,
            patch_size=self.patch_size,
            padding=(self.padding1, self.padding2),
            embed_dim=embed_dim,
            compute_dtype=compute_dtype))

    def __call__(self, x):
        # x: (B, C, H, W) NCHW, like PyTorch.  Returns (B, N, embed_dim).
        return self._forward(x, self._w2d, self._bias_row)


# --------------------------------- Demo ------------------------------------ #
if __name__ == "__main__":
    key = jax.random.PRNGKey(0)
    kx, kp = jax.random.split(key)

    B, C, H, W = 2, 4, 16, 16
    patch = (4, 4)
    embed_dim = 32

    x = jax.random.normal(kx, (B, C, H, W), jnp.float32)

    mod = PatchEmbedNew((H, W), patch, in_chans=C, embed_dim=embed_dim, key=kp)
    out = jax.block_until_ready(mod(x))

    n_patches = (H // patch[0]) * (W // patch[1])
    assert out.shape == (B, n_patches, embed_dim), out.shape
    assert out.dtype == x.dtype, out.dtype

    # Tight check: conv reference computed from bf16-rounded inputs with f32
    # accumulation (apples-to-apples with the MXU bf16 x bf16 -> f32 path).
    xr = x.astype(jnp.bfloat16).astype(jnp.float32)
    wr = mod.weight.astype(jnp.bfloat16).astype(jnp.float32)
    pad = [(mod.padding1, mod.padding1), (mod.padding2, mod.padding2)]
    ref = jax.lax.conv_general_dilated(
        xr, wr, window_strides=patch, padding=pad,
        dimension_numbers=("NCHW", "OIHW", "NCHW"),
    ) + mod.bias[None, :, None, None]
    ref = ref.reshape(B, embed_dim, -1).transpose(0, 2, 1)
    assert jnp.allclose(out, ref, atol=1e-3, rtol=1e-3), \
        float(jnp.max(jnp.abs(out - ref)))

    # Loose sanity check against the pure-f32 conv (bf16 input rounding only).
    ref_f32 = jax.lax.conv_general_dilated(
        x, mod.weight, window_strides=patch, padding=pad,
        dimension_numbers=("NCHW", "OIHW", "NCHW"),
    ) + mod.bias[None, :, None, None]
    ref_f32 = ref_f32.reshape(B, embed_dim, -1).transpose(0, 2, 1)
    assert jnp.allclose(out, ref_f32, atol=5e-2, rtol=5e-2), \
        float(jnp.max(jnp.abs(out - ref_f32)))

    print("KERNEL_OK")
</pallas_src>

<mosaic_0001>
module attributes {stable_mosaic.version = 11 : i64} {
  func.func @_patch_embed_kernel(%arg0: i32, %arg1: memref<128x64xbf16, #tpu.memory_space<vmem>>, %arg2: memref<64x128xbf16, #tpu.memory_space<vmem>>, %arg3: memref<1x128xf32, #tpu.memory_space<vmem>>, %arg4: memref<128x128xf32, #tpu.memory_space<vmem>>) attributes {dimension_semantics = [#tpu.dimension_semantics<parallel>], iteration_bounds = array<i64: 1>, scalar_prefetch = 0 : i64, scratch_operands = 0 : i64, tpu.core_type = #tpu.core_type<tc>, window_params = [{transform_indices = @transform_0, window_bounds = array<i64: 128, 64>}, {pipeline_mode = #tpu.pipeline_mode<synchronous>, transform_indices = @transform_1, window_bounds = array<i64: 64, 128>}, {pipeline_mode = #tpu.pipeline_mode<synchronous>, transform_indices = @transform_2, window_bounds = array<i64: 1, 128>}, {transform_indices = @transform_3, window_bounds = array<i64: 128, 128>}]} {
    %c0 = arith.constant 0 : index
    %c0_0 = arith.constant 0 : index
    %0 = vector.load %arg1[%c0, %c0_0] : memref<128x64xbf16, #tpu.memory_space<vmem>>, vector<128x64xbf16>
    %c0_1 = arith.constant 0 : index
    %c0_2 = arith.constant 0 : index
    %1 = vector.load %arg2[%c0_1, %c0_2] : memref<64x128xbf16, #tpu.memory_space<vmem>>, vector<64x128xbf16>
    %cst = arith.constant dense<0.000000e+00> : vector<128x128xf32>
    %2 = tpu.matmul %0, %1, %cst {dimension_numbers = #tpu.dot_dimension_numbers<[1], [0], [0], [1], [0, 0, 1, 1], [], []>} : vector<128x64xbf16>, vector<64x128xbf16>, vector<128x128xf32> -> vector<128x128xf32>
    %c0_3 = arith.constant 0 : index
    %c0_4 = arith.constant 0 : index
    %3 = vector.load %arg3[%c0_3, %c0_4] : memref<1x128xf32, #tpu.memory_space<vmem>>, vector<1x128xf32>
    %4 = vector.broadcast %3 : vector<1x128xf32> to vector<128x128xf32>
    %5 = arith.addf %2, %4 : vector<128x128xf32>
    %c0_5 = arith.constant 0 : index
    %c0_6 = arith.constant 0 : index
    %6 = vector.load %arg4[%c0_5, %c0_6] : memref<128x128xf32, #tpu.memory_space<vmem>>, vector<128x128xf32>
    tpu.vector_store %arg4[%c0_5, %c0_6], %5 {strides = array<i32>} : memref<128x128xf32, #tpu.memory_space<vmem>>, vector<128x128xf32>,
    return
  }
  func.func @transform_0(%arg0: i32) -> (i32, i32) {
    %c0_i32 = arith.constant 0 : i32
    %c0_i32_0 = arith.constant 0 : i32
    return %arg0, %c0_i32 : i32, i32
  }
  func.func @transform_1(%arg0: i32) -> (i32, i32) {
    %c0_i32 = arith.constant 0 : i32
    %c0_i32_0 = arith.constant 0 : i32
    %c0_i32_1 = arith.constant 0 : i32
    return %c0_i32, %c0_i32_0 : i32, i32
  }
  func.func @transform_2(%arg0: i32) -> (i32, i32) {
    %c0_i32 = arith.constant 0 : i32
    %c0_i32_0 = arith.constant 0 : i32
    %c0_i32_1 = arith.constant 0 : i32
    return %c0_i32, %c0_i32_0 : i32, i32
  }
  func.func @transform_3(%arg0: i32) -> (i32, i32) {
    %c0_i32 = arith.constant 0 : i32
    %c0_i32_0 = arith.constant 0 : i32
    return %arg0, %c0_i32 : i32, i32
  }
}

</mosaic_0001>

<llo_original>
// kernel: _patch_embed_forward.1
$region0: #{_patch_embed_forward.1}
  #allocation0 [shape = 'u32[]', space=smem, size = 0x4, offset = 0x4, fixed_abs, tag = 'smem constant byte address 0x4 - core index']
  #allocation1 [shape = 'u32[72,128]{1,0:T(1,128)}', space=vmem, size = 0x9000, scoped, tag = 'internal scratch']
  %s0 = inlined_call_operand.vmem [shape: bf16[128,64], index: 0, kind: input, shape index: {}]
  %s1 = inlined_call_operand.vmem [shape: bf16[64,128], index: 1, kind: input, shape index: {}]
  %s2 = inlined_call_operand.vmem [shape: f32[1,128], index: 2, kind: input, shape index: {}]
  %s3 = inlined_call_operand.vmem [shape: f32[128,128], index: 3, kind: output, shape index: {}]
  %s4 = sld [smem:[#allocation0]]
  $region22: #{_patch_embed_forward.1} parent=0
    _
  %s6 = ssub.s32 1, %s4
  %s7 = scalar_select 0, %s6, %s4
  // Predicated region
  $region2: #{_patch_embed_forward.1} parent=0 // pred_check
    _
  $region3: #{_patch_embed_forward.1} parent=0 // pred_check_branch
    %9 = sbr.rel (0) target = $region5
  $region4: #{_patch_embed_forward.1} parent=0 // pred_region
    _
  $region5: #{_patch_embed_forward.1} parent=0 // pred_fallthru
    _
  // Predicated region
  $region6: #{_patch_embed_forward.1} parent=0 // pred_check
    _
  $region7: #{_patch_embed_forward.1} parent=0 // pred_check_branch
    %11 = sbr.rel (0) target = $region9
  $region8: #{_patch_embed_forward.1} parent=0 // pred_region
    _
  $region9: #{_patch_embed_forward.1} parent=0 // pred_fallthru
    _
  // Predicated region
  $region10: #{_patch_embed_forward.1} parent=0 // pred_check
    _
  $region11: #{_patch_embed_forward.1} parent=0 // pred_check_branch
    %13 = sbr.rel (0) target = $region13
  $region12: #{_patch_embed_forward.1} parent=0 // pred_region
    _
  $region13: #{_patch_embed_forward.1} parent=0 // pred_fallthru
    _
  %v15 = vld [vmem:[%s0] sm:$0xf]
  %v16 = vld [vmem:[%s0 + $0x4] sm:$0xf]
  %v17 = vld [vmem:[%s0 + $0x8] sm:$0xf]
  %v18 = vld [vmem:[%s0 + $0xc] sm:$0xf]
  %v19 = vld [vmem:[%s0 + $0x10] sm:$0xf]
  %v20 = vld [vmem:[%s0 + $0x14] sm:$0xf]
  %v21 = vld [vmem:[%s0 + $0x18] sm:$0xf]
  %v22 = vld [vmem:[%s0 + $0x1c] sm:$0xf]
  %v23 = vld [vmem:[%s0 + $0x20] sm:$0xf]
  %v24 = vld [vmem:[%s0 + $0x24] sm:$0xf]
  %v25 = vld [vmem:[%s0 + $0x28] sm:$0xf]
  %v26 = vld [vmem:[%s0 + $0x2c] sm:$0xf]
  %v27 = vld [vmem:[%s0 + $0x30] sm:$0xf]
  %v28 = vld [vmem:[%s0 + $0x34] sm:$0xf]
  %v29 = vld [vmem:[%s0 + $0x38] sm:$0xf]
  %v30 = vld [vmem:[%s0 + $0x3c] sm:$0xf]
  %v31 = vld [vmem:[%s1] sm:$0xf]
  %v32 = vld [vmem:[%s1 + $0x4] sm:$0xf]
  %v33 = vld [vmem:[%s1 + $0x8] sm:$0xf]
  %v34 = vld [vmem:[%s1 + $0xc] sm:$0xf]
  %v35 = vld [vmem:[%s1 + $0x10] sm:$0xf]
  %v36 = vld [vmem:[%s1 + $0x14] sm:$0xf]
  %v37 = vld [vmem:[%s1 + $0x18] sm:$0xf]
  %v38 = vld [vmem:[%s1 + $0x1c] sm:$0xf]
  %v39 = vld [vmem:[%s2] sm:$0x1]
  %v41 = vperm.slane %v39, 0
  %v59 = vunpack.c.l.b16 %v15
  %v60 = vunpack.c.l.b16 %v16
  %v61 = vunpack.c.l.b16 %v17
  %v62 = vunpack.c.l.b16 %v18
  %v63 = vunpack.c.l.b16 %v19
  %v64 = vunpack.c.l.b16 %v20
  %v65 = vunpack.c.l.b16 %v21
  %v66 = vunpack.c.l.b16 %v22
  %v67 = vunpack.c.l.b16 %v23
  %v68 = vunpack.c.l.b16 %v24
  %v69 = vunpack.c.l.b16 %v25
  %v70 = vunpack.c.l.b16 %v26
  %v71 = vunpack.c.l.b16 %v27
  %v72 = vunpack.c.l.b16 %v28
  %v73 = vunpack.c.l.b16 %v29
  %v74 = vunpack.c.l.b16 %v30
  %v75 = vpack.c.b16 %v60, %v59
  %v76 = vpack.c.b16 %v62, %v61
  %v77 = vpack.c.b16 %v64, %v63
  %v78 = vpack.c.b16 %v66, %v65
  %v79 = vpack.c.b16 %v68, %v67
  %v80 = vpack.c.b16 %v70, %v69
  %v81 = vpack.c.b16 %v72, %v71
  %v82 = vpack.c.b16 %v74, %v73
  %v91 = vunpack.c.l.b16 %v31
  %v92 = vunpack.c.l.b16 %v32
  %v93 = vunpack.c.l.b16 %v33
  %v94 = vunpack.c.l.b16 %v34
  %v95 = vunpack.c.l.b16 %v35
  %v96 = vunpack.c.l.b16 %v36
  %v97 = vunpack.c.l.b16 %v37
  %v98 = vunpack.c.l.b16 %v38
  %v99 = vpack.c.b16 %v92, %v91
  %v100 = vpack.c.b16 %v94, %v93
  %v101 = vpack.c.b16 %v96, %v95
  %v102 = vpack.c.b16 %v98, %v97
  %vm107 = vcmask 523264
  %v109 = vsel %vm107, %v75, 0
  %v112 = vsel %vm107, %v76, 0
  %v115 = vsel %vm107, %v77, 0
  %v118 = vsel %vm107, %v78, 0
  %v121 = vsel %vm107, %v79, 0
  %v124 = vsel %vm107, %v80, 0
  %v127 = vsel %vm107, %v81, 0
  %v130 = vsel %vm107, %v82, 0
  %132 = vmatpush.bf16.msra.mxu0 0
  %133 = vmatpush.bf16.msra.mxu0 0
  %134 = vmatpush.bf16.msra.mxu0 0
  %135 = vmatpush.bf16.msra.mxu0 0
  %136 = vmatpush.bf16.msra.mxu0 %v102
  %137 = vmatpush.bf16.msra.mxu0 %v101
  %138 = vmatpush.bf16.msra.mxu0 %v100
  %139 = vmatpush.bf16.msra.mxu0 %v99
  %140 = vmatmul.bf16.gmra.mxu0 %v109
  %v141 = vpop.f32.mrf.mxu0
  %v142 = vadd.f32 %v41, %v141
  %v143 = vpop.f32.mrf.mxu0
  %v144 = vadd.f32 %v41, %v143
  %145 = vmatmul.bf16.gmra.mxu0 %v112
  %v146 = vpop.f32.mrf.mxu0
  %v147 = vadd.f32 %v41, %v146
  %v148 = vpop.f32.mrf.mxu0
  %v149 = vadd.f32 %v41, %v148
  %150 = vmatmul.bf16.gmra.mxu0 %v115
  %v151 = vpop.f32.mrf.mxu0
  %v152 = vadd.f32 %v41, %v151
  %v153 = vpop.f32.mrf.mxu0
  %v154 = vadd.f32 %v41, %v153
  %155 = vmatmul.bf16.gmra.mxu0 %v118
  %v156 = vpop.f32.mrf.mxu0
  %v157 = vadd.f32 %v41, %v156
  %v158 = vpop.f32.mrf.mxu0
  %v159 = vadd.f32 %v41, %v158
  %160 = vmatmul.bf16.gmra.mxu0 %v121
  %v161 = vpop.f32.mrf.mxu0
  %v162 = vadd.f32 %v41, %v161
  %v163 = vpop.f32.mrf.mxu0
  %v164 = vadd.f32 %v41, %v163
  %165 = vmatmul.bf16.gmra.mxu0 %v124
  %v166 = vpop.f32.mrf.mxu0
  %v167 = vadd.f32 %v41, %v166
  %v168 = vpop.f32.mrf.mxu0
  %v169 = vadd.f32 %v41, %v168
  %170 = vmatmul.bf16.gmra.mxu0 %v127
  %v171 = vpop.f32.mrf.mxu0
  %v172 = vadd.f32 %v41, %v171
  %v173 = vpop.f32.mrf.mxu0
  %v174 = vadd.f32 %v41, %v173
  %175 = vmatmul.bf16.gmra.mxu0 %v130
  %v176 = vpop.f32.mrf.mxu0
  %v177 = vadd.f32 %v41, %v176
  %v178 = vpop.f32.mrf.mxu0
  %v179 = vadd.f32 %v41, %v178
  %180 = vdwg.mxu0
  %181 = vst [vmem:[%s3] sm:$0xff] %v142
  %182 = vst [vmem:[%s3 + $0x8] sm:$0xff] %v144
  %183 = vst [vmem:[%s3 + $0x10] sm:$0xff] %v147
  %184 = vst [vmem:[%s3 + $0x18] sm:$0xff] %v149
  %185 = vst [vmem:[%s3 + $0x20] sm:$0xff] %v152
  %186 = vst [vmem:[%s3 + $0x28] sm:$0xff] %v154
  %187 = vst [vmem:[%s3 + $0x30] sm:$0xff] %v157
  %188 = vst [vmem:[%s3 + $0x38] sm:$0xff] %v159
  %189 = vst [vmem:[%s3 + $0x40] sm:$0xff] %v162
  %190 = vst [vmem:[%s3 + $0x48] sm:$0xff] %v164
  %191 = vst [vmem:[%s3 + $0x50] sm:$0xff] %v167
  %192 = vst [vmem:[%s3 + $0x58] sm:$0xff] %v169
  %193 = vst [vmem:[%s3 + $0x60] sm:$0xff] %v172
  %194 = vst [vmem:[%s3 + $0x68] sm:$0xff] %v174
  %195 = vst [vmem:[%s3 + $0x70] sm:$0xff] %v177
  %196 = vst [vmem:[%s3 + $0x78] sm:$0xff] %v179
  // Predicated region
  $region14: #{_patch_embed_forward.1} parent=0 // pred_check
    _
  $region15: #{_patch_embed_forward.1} parent=0 // pred_check_branch
    %198 = sbr.rel (0) target = $region17
  $region16: #{_patch_embed_forward.1} parent=0 // pred_region
    _
  $region17: #{_patch_embed_forward.1} parent=0 // pred_fallthru
    _
  // Predicated region
  $region18: #{_patch_embed_forward.1} parent=0 // pred_check
    _
  $region19: #{_patch_embed_forward.1} parent=0 // pred_check_branch
    %200 = sbr.rel (0) target = $region21
  $region20: #{_patch_embed_forward.1} parent=0 // pred_region
    _
  $region21: #{_patch_embed_forward.1} parent=0 // pred_fallthru
    _

</llo_original>
